<compile_context>
chip_gen: v6e
topology: v6e:2x2x1
jax: 0.10.0
libtpu: 0.0.40
codegen_flags: <defaults>
</compile_context>

<pallas_src>
import functools

import jax
import jax.numpy as jnp
from jax import lax
from jax.experimental import pallas as pl
from jax.experimental.pallas import tpu as pltpu


def lstm_recurrence_kernel(gx_ref, whh_ref, hT_ref, h_sc, c_sc, *,
                           seq_len, chunk):
    """One grid step processes `chunk` timesteps of the recurrence.

    gx_ref : (chunk, B, 4H) precomputed x_t @ W_ih + b, gate order [i, f, o, g]
    whh_ref: (H, 4H)        recurrent weight (transposed), gate order [i,f,o,g]
    hT_ref : (B, H)         final hidden state (output)
    h_sc, c_sc: (B, H) f32  persistent hidden / cell state scratch
    """
    ci = pl.program_id(0)

    @pl.when(ci == 0)
    def _init():
        h_sc[...] = jnp.zeros_like(h_sc)
        c_sc[...] = jnp.zeros_like(c_sc)

    whh = whh_ref[...]                      # (H, 4H) resident across the loop
    H = h_sc.shape[-1]
    base = ci * chunk
    has_tail = (seq_len % chunk) != 0       # static Python bool

    def step(s, carry):
        h_prev = h_sc[...]
        c_prev = c_sc[...]
        # Only the recurrent matmul is on the serial critical path now.
        gates = gx_ref[s] + jnp.dot(h_prev, whh,
                                    preferred_element_type=jnp.float32)
        sig = jax.nn.sigmoid(gates[:, :3 * H])     # one contiguous sigmoid slab
        i_g = sig[:, 0 * H:1 * H]
        f_g = sig[:, 1 * H:2 * H]
        o_g = sig[:, 2 * H:3 * H]
        g_g = jnp.tanh(gates[:, 3 * H:4 * H])      # single tanh slab
        c_new = f_g * c_prev + i_g * g_g
        h_new = o_g * jnp.tanh(c_new)
        if has_tail:
            # Mask timesteps past the end of the sequence (partial last chunk).
            valid = (base + s) < seq_len
            c_new = jnp.where(valid, c_new, c_prev)
            h_new = jnp.where(valid, h_new, h_prev)
        c_sc[...] = c_new
        h_sc[...] = h_new
        return carry

    lax.fori_loop(0, chunk, step, 0, unroll=(chunk <= 32))

    # Written every chunk (constant output block index -> stays VMEM resident);
    # no reliance on a last-iteration-only store.
    hT_ref[...] = h_sc[...]


def _reorder_gates_ifgo_to_ifog(w):
    """Permute the trailing 4H gate axis from PyTorch [i,f,g,o] to [i,f,o,g]."""
    H = w.shape[-1] // 4
    return jnp.concatenate(
        [w[..., :2 * H], w[..., 3 * H:], w[..., 2 * H:3 * H]], axis=-1)


def candle_lstm_pallas(tokens, params, *, time_chunk=128):
    """tokens: (B, T) int32. Returns (B, output_dim) float32."""
    emb_table = params["embedding"]
    w_ih = _reorder_gates_ifgo_to_ifog(params["w_ih"])   # (E, 4H)
    w_hh = _reorder_gates_ifgo_to_ifog(params["w_hh"])   # (H, 4H)
    b = _reorder_gates_ifgo_to_ifog(params["b"])         # (1, 4H)
    w_fc, b_fc = params["w_fc"], params["b_fc"]

    B, T = tokens.shape
    H = w_hh.shape[0]
    G = 4 * H

    # Embedding lookup + input projection + bias for ALL timesteps as one
    # MXU-friendly matmul, emitted time-major (fuses the layout change).
    x_emb = jnp.take(emb_table, tokens, axis=0)                  # (B, T, E)
    gates_x = jnp.einsum('bte,eg->tbg', x_emb, w_ih) + b         # (T, B, 4H)

    # Pad batch to the f32 sublane multiple (8). Padded rows are independent
    # and get sliced off after the kernel.
    B_pad = max(8, -(-B // 8) * 8)
    if B_pad != B:
        gates_x = jnp.pad(gates_x, ((0, 0), (0, B_pad - B), (0, 0)))

    ct = min(time_chunk, T)
    num_chunks = pl.cdiv(T, ct)

    grid_spec = pltpu.PrefetchScalarGridSpec(
        num_scalar_prefetch=0,
        grid=(num_chunks,),
        in_specs=[
            pl.BlockSpec((ct, B_pad, G), lambda c: (c, 0, 0)),   # gate chunk
            pl.BlockSpec((H, G), lambda c: (0, 0)),              # W_hh^T
        ],
        out_specs=pl.BlockSpec((B_pad, H), lambda c: (0, 0)),    # h_T
        scratch_shapes=[
            pltpu.VMEM((B_pad, H), jnp.float32),   # h state
            pltpu.VMEM((B_pad, H), jnp.float32),   # c state
        ],
    )

    h_T = pl.pallas_call(
        functools.partial(lstm_recurrence_kernel, seq_len=T, chunk=ct),
        out_shape=jax.ShapeDtypeStruct((B_pad, H), jnp.float32),
        grid_spec=grid_spec,
        compiler_params=pltpu.CompilerParams(
            dimension_semantics=("arbitrary",)),
    )(gates_x, w_hh)

    # Tiny (H, 4) head done in JAX on the returned h_T (perf review #5).
    return jax.nn.sigmoid(h_T[:B] @ w_fc + b_fc[0])


def candle_lstm_ref(tokens, params):
    """Pure-JAX reference (mirrors PyTorch semantics, gate order [i,f,g,o])."""
    emb_table, w_ih, w_hh, b, w_fc, b_fc = (
        params["embedding"], params["w_ih"], params["w_hh"],
        params["b"], params["w_fc"], params["b_fc"])
    H = w_hh.shape[0]
    x = jnp.take(emb_table, tokens, axis=0)            # (B, T, E)
    B = x.shape[0]

    def step(carry, x_t):
        h, c = carry
        gates = x_t @ w_ih + h @ w_hh + b[0]
        i = jax.nn.sigmoid(gates[:, 0 * H:1 * H])
        f = jax.nn.sigmoid(gates[:, 1 * H:2 * H])
        g = jnp.tanh(gates[:, 2 * H:3 * H])
        o = jax.nn.sigmoid(gates[:, 3 * H:4 * H])
        c = f * c + i * g
        h = o * jnp.tanh(c)
        return (h, c), None

    h0 = jnp.zeros((B, H), jnp.float32)
    c0 = jnp.zeros((B, H), jnp.float32)
    (h_T, _), _ = lax.scan(step, (h0, c0), jnp.transpose(x, (1, 0, 2)))
    return jax.nn.sigmoid(h_T @ w_fc + b_fc[0])


def make_params(key, vocab_size, embedding_dim, hidden_dim, output_dim):
    ks = jax.random.split(key, 7)
    k = 1.0 / jnp.sqrt(hidden_dim)
    u = lambda kk, shape, s: jax.random.uniform(kk, shape, jnp.float32, -s, s)
    return {
        "embedding": jax.random.normal(ks[0], (vocab_size, embedding_dim),
                                       jnp.float32),
        # stored transposed: (in_features, 4H) / (H, 4H), PyTorch order [i,f,g,o]
        "w_ih": u(ks[1], (embedding_dim, 4 * hidden_dim), k),
        "w_hh": u(ks[2], (hidden_dim, 4 * hidden_dim), k),
        # combined b_ih + b_hh, kept 2D
        "b": u(ks[3], (1, 4 * hidden_dim), k) + u(ks[4], (1, 4 * hidden_dim), k),
        "w_fc": u(ks[5], (hidden_dim, output_dim), 1.0 / jnp.sqrt(hidden_dim)),
        "b_fc": u(ks[6], (1, output_dim), 1.0 / jnp.sqrt(hidden_dim)),
    }


if __name__ == "__main__":
    vocab_size, embedding_dim, hidden_dim, output_dim = 50, 32, 32, 4
    B, T = 2, 8

    key = jax.random.PRNGKey(0)
    k_param, k_tok = jax.random.split(key)
    params = make_params(k_param, vocab_size, embedding_dim, hidden_dim,
                         output_dim)
    tokens = jax.random.randint(k_tok, (B, T), 0, vocab_size, dtype=jnp.int32)

    fwd = jax.jit(candle_lstm_pallas)
    out = jax.block_until_ready(fwd(tokens, params))
    ref = jax.block_until_ready(candle_lstm_ref(tokens, params))

    assert out.shape == (B, output_dim)
    assert jnp.allclose(out, ref, atol=2e-5, rtol=2e-5), (out, ref)
    print("KERNEL_OK")
</pallas_src>

<mosaic_0001>
module attributes {stable_mosaic.version = 11 : i64} {
  func.func @lstm_recurrence_kernel(%arg0: i32, %arg1: memref<8x8x128xf32, #tpu.memory_space<vmem>>, %arg2: memref<32x128xf32, #tpu.memory_space<vmem>>, %arg3: memref<8x32xf32, #tpu.memory_space<vmem>>, %arg4: memref<8x32xf32, #tpu.memory_space<vmem>>, %arg5: memref<8x32xf32, #tpu.memory_space<vmem>>) attributes {dimension_semantics = [#tpu.dimension_semantics<arbitrary>], iteration_bounds = array<i64: 1>, scalar_prefetch = 0 : i64, scratch_operands = 2 : i64, tpu.core_type = #tpu.core_type<tc>, window_params = [{transform_indices = @transform_0, window_bounds = array<i64: 8, 8, 128>}, {pipeline_mode = #tpu.pipeline_mode<synchronous>, transform_indices = @transform_1, window_bounds = array<i64: 32, 128>}, {pipeline_mode = #tpu.pipeline_mode<synchronous>, transform_indices = @transform_2, window_bounds = array<i64: 8, 32>}]} {
    %c0_i32 = arith.constant 0 : i32
    %0 = arith.cmpi eq, %arg0, %c0_i32 : i32
    %1 = arith.extui %0 : i1 to i32
    %c0_i32_0 = arith.constant 0 : i32
    %2 = arith.cmpi ne, %1, %c0_i32_0 : i32
    scf.if %2 {
      %cst_102 = arith.constant 0.000000e+00 : f32
      %206 = vector.broadcast %cst_102 : f32 to vector<8x32xf32>
      %c0_103 = arith.constant 0 : index
      %c0_104 = arith.constant 0 : index
      %207 = vector.load %arg4[%c0_103, %c0_104] : memref<8x32xf32, #tpu.memory_space<vmem>>, vector<8x32xf32>
      tpu.vector_store %arg4[%c0_103, %c0_104], %206 {strides = array<i32>} : memref<8x32xf32, #tpu.memory_space<vmem>>, vector<8x32xf32>,
      %cst_105 = arith.constant 0.000000e+00 : f32
      %208 = vector.broadcast %cst_105 : f32 to vector<8x32xf32>
      %c0_106 = arith.constant 0 : index
      %c0_107 = arith.constant 0 : index
      %209 = vector.load %arg5[%c0_106, %c0_107] : memref<8x32xf32, #tpu.memory_space<vmem>>, vector<8x32xf32>
      tpu.vector_store %arg5[%c0_106, %c0_107], %208 {strides = array<i32>} : memref<8x32xf32, #tpu.memory_space<vmem>>, vector<8x32xf32>,
    } else {
    }
    %c0 = arith.constant 0 : index
    %c0_1 = arith.constant 0 : index
    %3 = vector.load %arg2[%c0, %c0_1] : memref<32x128xf32, #tpu.memory_space<vmem>>, vector<32x128xf32>
    %c0_i32_2 = arith.constant 0 : i32
    %c0_3 = arith.constant 0 : index
    %c0_4 = arith.constant 0 : index
    %4 = vector.load %arg4[%c0_3, %c0_4] : memref<8x32xf32, #tpu.memory_space<vmem>>, vector<8x32xf32>
    %c0_5 = arith.constant 0 : index
    %c0_6 = arith.constant 0 : index
    %5 = vector.load %arg5[%c0_5, %c0_6] : memref<8x32xf32, #tpu.memory_space<vmem>>, vector<8x32xf32>
    %6 = arith.index_cast %c0_i32_2 : i32 to index
    %c0_7 = arith.constant 0 : index
    %c0_8 = arith.constant 0 : index
    %7 = vector.load %arg1[%6, %c0_7, %c0_8] : memref<8x8x128xf32, #tpu.memory_space<vmem>>, vector<1x8x128xf32>
    %8 = vector.shape_cast %7 : vector<1x8x128xf32> to vector<8x128xf32>
    %cst = arith.constant dense<0.000000e+00> : vector<8x128xf32>
    %9 = tpu.matmul %4, %3, %cst {dimension_numbers = #tpu.dot_dimension_numbers<[1], [0], [0], [1], [0, 0, 1, 1], [], []>} : vector<8x32xf32>, vector<32x128xf32>, vector<8x128xf32> -> vector<8x128xf32>
    %10 = arith.addf %8, %9 : vector<8x128xf32>
    %11 = vector.extract_strided_slice %10 {offsets = [0, 0], sizes = [8, 96], strides = [1, 1]} : vector<8x128xf32> to vector<8x96xf32>
    %12 = arith.negf %11 : vector<8x96xf32>
    %13 = math.exp %12 : vector<8x96xf32>
    %cst_9 = arith.constant 1.000000e+00 : f32
    %14 = vector.broadcast %cst_9 : f32 to vector<8x96xf32>
    %15 = arith.addf %14, %13 : vector<8x96xf32>
    %16 = arith.divf %14, %15 : vector<8x96xf32>
    %17 = vector.extract_strided_slice %16 {offsets = [0, 0], sizes = [8, 32], strides = [1, 1]} : vector<8x96xf32> to vector<8x32xf32>
    %18 = vector.extract_strided_slice %16 {offsets = [0, 32], sizes = [8, 32], strides = [1, 1]} : vector<8x96xf32> to vector<8x32xf32>
    %19 = vector.extract_strided_slice %16 {offsets = [0, 64], sizes = [8, 32], strides = [1, 1]} : vector<8x96xf32> to vector<8x32xf32>
    %20 = vector.extract_strided_slice %10 {offsets = [0, 96], sizes = [8, 32], strides = [1, 1]} : vector<8x128xf32> to vector<8x32xf32>
    %21 = math.tanh %20 : vector<8x32xf32>
    %22 = arith.mulf %18, %5 : vector<8x32xf32>
    %23 = arith.mulf %17, %21 : vector<8x32xf32>
    %24 = arith.addf %22, %23 : vector<8x32xf32>
    %25 = math.tanh %24 : vector<8x32xf32>
    %26 = arith.mulf %19, %25 : vector<8x32xf32>
    %c0_10 = arith.constant 0 : index
    %c0_11 = arith.constant 0 : index
    %27 = vector.load %arg5[%c0_10, %c0_11] : memref<8x32xf32, #tpu.memory_space<vmem>>, vector<8x32xf32>
    tpu.vector_store %arg5[%c0_10, %c0_11], %24 {strides = array<i32>} : memref<8x32xf32, #tpu.memory_space<vmem>>, vector<8x32xf32>,
    %c0_12 = arith.constant 0 : index
    %c0_13 = arith.constant 0 : index
    %28 = vector.load %arg4[%c0_12, %c0_13] : memref<8x32xf32, #tpu.memory_space<vmem>>, vector<8x32xf32>
    tpu.vector_store %arg4[%c0_12, %c0_13], %26 {strides = array<i32>} : memref<8x32xf32, #tpu.memory_space<vmem>>, vector<8x32xf32>,
    %c1_i32 = arith.constant 1 : i32
    %c0_14 = arith.constant 0 : index
    %c0_15 = arith.constant 0 : index
    %29 = vector.load %arg4[%c0_14, %c0_15] : memref<8x32xf32, #tpu.memory_space<vmem>>, vector<8x32xf32>
    %c0_16 = arith.constant 0 : index
    %c0_17 = arith.constant 0 : index
    %30 = vector.load %arg5[%c0_16, %c0_17] : memref<8x32xf32, #tpu.memory_space<vmem>>, vector<8x32xf32>
    %31 = arith.index_cast %c1_i32 : i32 to index
    %c0_18 = arith.constant 0 : index
    %c0_19 = arith.constant 0 : index
    %32 = vector.load %arg1[%31, %c0_18, %c0_19] : memref<8x8x128xf32, #tpu.memory_space<vmem>>, vector<1x8x128xf32>
    %33 = vector.shape_cast %32 : vector<1x8x128xf32> to vector<8x128xf32>
    %cst_20 = arith.constant dense<0.000000e+00> : vector<8x128xf32>
    %34 = tpu.matmul %29, %3, %cst_20 {dimension_numbers = #tpu.dot_dimension_numbers<[1], [0], [0], [1], [0, 0, 1, 1], [], []>} : vector<8x32xf32>, vector<32x128xf32>, vector<8x128xf32> -> vector<8x128xf32>
    %35 = arith.addf %33, %34 : vector<8x128xf32>
    %36 = vector.extract_strided_slice %35 {offsets = [0, 0], sizes = [8, 96], strides = [1, 1]} : vector<8x128xf32> to vector<8x96xf32>
    %37 = arith.negf %36 : vector<8x96xf32>
    %38 = math.exp %37 : vector<8x96xf32>
    %cst_21 = arith.constant 1.000000e+00 : f32
    %39 = vector.broadcast %cst_21 : f32 to vector<8x96xf32>
    %40 = arith.addf %39, %38 : vector<8x96xf32>
    %41 = arith.divf %39, %40 : vector<8x96xf32>
    %42 = vector.extract_strided_slice %41 {offsets = [0, 0], sizes = [8, 32], strides = [1, 1]} : vector<8x96xf32> to vector<8x32xf32>
    %43 = vector.extract_strided_slice %41 {offsets = [0, 32], sizes = [8, 32], strides = [1, 1]} : vector<8x96xf32> to vector<8x32xf32>
    %44 = vector.extract_strided_slice %41 {offsets = [0, 64], sizes = [8, 32], strides = [1, 1]} : vector<8x96xf32> to vector<8x32xf32>
    %45 = vector.extract_strided_slice %35 {offsets = [0, 96], sizes = [8, 32], strides = [1, 1]} : vector<8x128xf32> to vector<8x32xf32>
    %46 = math.tanh %45 : vector<8x32xf32>
    %47 = arith.mulf %43, %30 : vector<8x32xf32>
    %48 = arith.mulf %42, %46 : vector<8x32xf32>
    %49 = arith.addf %47, %48 : vector<8x32xf32>
    %50 = math.tanh %49 : vector<8x32xf32>
    %51 = arith.mulf %44, %50 : vector<8x32xf32>
    %c0_22 = arith.constant 0 : index
    %c0_23 = arith.constant 0 : index
    %52 = vector.load %arg5[%c0_22, %c0_23] : memref<8x32xf32, #tpu.memory_space<vmem>>, vector<8x32xf32>
    tpu.vector_store %arg5[%c0_22, %c0_23], %49 {strides = array<i32>} : memref<8x32xf32, #tpu.memory_space<vmem>>, vector<8x32xf32>,
    %c0_24 = arith.constant 0 : index
    %c0_25 = arith.constant 0 : index
    %53 = vector.load %arg4[%c0_24, %c0_25] : memref<8x32xf32, #tpu.memory_space<vmem>>, vector<8x32xf32>
    tpu.vector_store %arg4[%c0_24, %c0_25], %51 {strides = array<i32>} : memref<8x32xf32, #tpu.memory_space<vmem>>, vector<8x32xf32>,
    %c2_i32 = arith.constant 2 : i32
    %c0_26 = arith.constant 0 : index
    %c0_27 = arith.constant 0 : index
    %54 = vector.load %arg4[%c0_26, %c0_27] : memref<8x32xf32, #tpu.memory_space<vmem>>, vector<8x32xf32>
    %c0_28 = arith.constant 0 : index
    %c0_29 = arith.constant 0 : index
    %55 = vector.load %arg5[%c0_28, %c0_29] : memref<8x32xf32, #tpu.memory_space<vmem>>, vector<8x32xf32>
    %56 = arith.index_cast %c2_i32 : i32 to index
    %c0_30 = arith.constant 0 : index
    %c0_31 = arith.constant 0 : index
    %57 = vector.load %arg1[%56, %c0_30, %c0_31] : memref<8x8x128xf32, #tpu.memory_space<vmem>>, vector<1x8x128xf32>
    %58 = vector.shape_cast %57 : vector<1x8x128xf32> to vector<8x128xf32>
    %cst_32 = arith.constant dense<0.000000e+00> : vector<8x128xf32>
    %59 = tpu.matmul %54, %3, %cst_32 {dimension_numbers = #tpu.dot_dimension_numbers<[1], [0], [0], [1], [0, 0, 1, 1], [], []>} : vector<8x32xf32>, vector<32x128xf32>, vector<8x128xf32> -> vector<8x128xf32>
    %60 = arith.addf %58, %59 : vector<8x128xf32>
    %61 = vector.extract_strided_slice %60 {offsets = [0, 0], sizes = [8, 96], strides = [1, 1]} : vector<8x128xf32> to vector<8x96xf32>
    %62 = arith.negf %61 : vector<8x96xf32>
    %63 = math.exp %62 : vector<8x96xf32>
    %cst_33 = arith.constant 1.000000e+00 : f32
    %64 = vector.broadcast %cst_33 : f32 to vector<8x96xf32>
    %65 = arith.addf %64, %63 : vector<8x96xf32>
    %66 = arith.divf %64, %65 : vector<8x96xf32>
    %67 = vector.extract_strided_slice %66 {offsets = [0, 0], sizes = [8, 32], strides = [1, 1]} : vector<8x96xf32> to vector<8x32xf32>
    %68 = vector.extract_strided_slice %66 {offsets = [0, 32], sizes = [8, 32], strides = [1, 1]} : vector<8x96xf32> to vector<8x32xf32>
    %69 = vector.extract_strided_slice %66 {offsets = [0, 64], sizes = [8, 32], strides = [1, 1]} : vector<8x96xf32> to vector<8x32xf32>
    %70 = vector.extract_strided_slice %60 {offsets = [0, 96], sizes = [8, 32], strides = [1, 1]} : vector<8x128xf32> to vector<8x32xf32>
    %71 = math.tanh %70 : vector<8x32xf32>
    %72 = arith.mulf %68, %55 : vector<8x32xf32>
    %73 = arith.mulf %67, %71 : vector<8x32xf32>
    %74 = arith.addf %72, %73 : vector<8x32xf32>
    %75 = math.tanh %74 : vector<8x32xf32>
    %76 = arith.mulf %69, %75 : vector<8x32xf32>
    %c0_34 = arith.constant 0 : index
    %c0_35 = arith.constant 0 : index
    %77 = vector.load %arg5[%c0_34, %c0_35] : memref<8x32xf32, #tpu.memory_space<vmem>>, vector<8x32xf32>
    tpu.vector_store %arg5[%c0_34, %c0_35], %74 {strides = array<i32>} : memref<8x32xf32, #tpu.memory_space<vmem>>, vector<8x32xf32>,
    %c0_36 = arith.constant 0 : index
    %c0_37 = arith.constant 0 : index
    %78 = vector.load %arg4[%c0_36, %c0_37] : memref<8x32xf32, #tpu.memory_space<vmem>>, vector<8x32xf32>
    tpu.vector_store %arg4[%c0_36, %c0_37], %76 {strides = array<i32>} : memref<8x32xf32, #tpu.memory_space<vmem>>, vector<8x32xf32>,
    %c3_i32 = arith.constant 3 : i32
    %c0_38 = arith.constant 0 : index
    %c0_39 = arith.constant 0 : index
    %79 = vector.load %arg4[%c0_38, %c0_39] : memref<8x32xf32, #tpu.memory_space<vmem>>, vector<8x32xf32>
    %c0_40 = arith.constant 0 : index
    %c0_41 = arith.constant 0 : index
    %80 = vector.load %arg5[%c0_40, %c0_41] : memref<8x32xf32, #tpu.memory_space<vmem>>, vector<8x32xf32>
    %81 = arith.index_cast %c3_i32 : i32 to index
    %c0_42 = arith.constant 0 : index
    %c0_43 = arith.constant 0 : index
    %82 = vector.load %arg1[%81, %c0_42, %c0_43] : memref<8x8x128xf32, #tpu.memory_space<vmem>>, vector<1x8x128xf32>
    %83 = vector.shape_cast %82 : vector<1x8x128xf32> to vector<8x128xf32>
    %cst_44 = arith.constant dense<0.000000e+00> : vector<8x128xf32>
    %84 = tpu.matmul %79, %3, %cst_44 {dimension_numbers = #tpu.dot_dimension_numbers<[1], [0], [0], [1], [0, 0, 1, 1], [], []>} : vector<8x32xf32>, vector<32x128xf32>, vector<8x128xf32> -> vector<8x128xf32>
    %85 = arith.addf %83, %84 : vector<8x128xf32>
    %86 = vector.extract_strided_slice %85 {offsets = [0, 0], sizes = [8, 96], strides = [1, 1]} : vector<8x128xf32> to vector<8x96xf32>
    %87 = arith.negf %86 : vector<8x96xf32>
    %88 = math.exp %87 : vector<8x96xf32>
    %cst_45 = arith.constant 1.000000e+00 : f32
    %89 = vector.broadcast %cst_45 : f32 to vector<8x96xf32>
    %90 = arith.addf %89, %88 : vector<8x96xf32>
    %91 = arith.divf %89, %90 : vector<8x96xf32>
    %92 = vector.extract_strided_slice %91 {offsets = [0, 0], sizes = [8, 32], strides = [1, 1]} : vector<8x96xf32> to vector<8x32xf32>
    %93 = vector.extract_strided_slice %91 {offsets = [0, 32], sizes = [8, 32], strides = [1, 1]} : vector<8x96xf32> to vector<8x32xf32>
    %94 = vector.extract_strided_slice %91 {offsets = [0, 64], sizes = [8, 32], strides = [1, 1]} : vector<8x96xf32> to vector<8x32xf32>
    %95 = vector.extract_strided_slice %85 {offsets = [0, 96], sizes = [8, 32], strides = [1, 1]} : vector<8x128xf32> to vector<8x32xf32>
    %96 = math.tanh %95 : vector<8x32xf32>
    %97 = arith.mulf %93, %80 : vector<8x32xf32>
    %98 = arith.mulf %92, %96 : vector<8x32xf32>
    %99 = arith.addf %97, %98 : vector<8x32xf32>
    %100 = math.tanh %99 : vector<8x32xf32>
    %101 = arith.mulf %94, %100 : vector<8x32xf32>
    %c0_46 = arith.constant 0 : index
    %c0_47 = arith.constant 0 : index
    %102 = vector.load %arg5[%c0_46, %c0_47] : memref<8x32xf32, #tpu.memory_space<vmem>>, vector<8x32xf32>
    tpu.vector_store %arg5[%c0_46, %c0_47], %99 {strides = array<i32>} : memref<8x32xf32, #tpu.memory_space<vmem>>, vector<8x32xf32>,
    %c0_48 = arith.constant 0 : index
    %c0_49 = arith.constant 0 : index
    %103 = vector.load %arg4[%c0_48, %c0_49] : memref<8x32xf32, #tpu.memory_space<vmem>>, vector<8x32xf32>
    tpu.vector_store %arg4[%c0_48, %c0_49], %101 {strides = array<i32>} : memref<8x32xf32, #tpu.memory_space<vmem>>, vector<8x32xf32>,
    %c4_i32 = arith.constant 4 : i32
    %c0_50 = arith.constant 0 : index
    %c0_51 = arith.constant 0 : index
    %104 = vector.load %arg4[%c0_50, %c0_51] : memref<8x32xf32, #tpu.memory_space<vmem>>, vector<8x32xf32>
    %c0_52 = arith.constant 0 : index
    %c0_53 = arith.constant 0 : index
    %105 = vector.load %arg5[%c0_52, %c0_53] : memref<8x32xf32, #tpu.memory_space<vmem>>, vector<8x32xf32>
    %106 = arith.index_cast %c4_i32 : i32 to index
    %c0_54 = arith.constant 0 : index
    %c0_55 = arith.constant 0 : index
    %107 = vector.load %arg1[%106, %c0_54, %c0_55] : memref<8x8x128xf32, #tpu.memory_space<vmem>>, vector<1x8x128xf32>
    %108 = vector.shape_cast %107 : vector<1x8x128xf32> to vector<8x128xf32>
    %cst_56 = arith.constant dense<0.000000e+00> : vector<8x128xf32>
    %109 = tpu.matmul %104, %3, %cst_56 {dimension_numbers = #tpu.dot_dimension_numbers<[1], [0], [0], [1], [0, 0, 1, 1], [], []>} : vector<8x32xf32>, vector<32x128xf32>, vector<8x128xf32> -> vector<8x128xf32>
    %110 = arith.addf %108, %109 : vector<8x128xf32>
    %111 = vector.extract_strided_slice %110 {offsets = [0, 0], sizes = [8, 96], strides = [1, 1]} : vector<8x128xf32> to vector<8x96xf32>
    %112 = arith.negf %111 : vector<8x96xf32>
    %113 = math.exp %112 : vector<8x96xf32>
    %cst_57 = arith.constant 1.000000e+00 : f32
    %114 = vector.broadcast %cst_57 : f32 to vector<8x96xf32>
    %115 = arith.addf %114, %113 : vector<8x96xf32>
    %116 = arith.divf %114, %115 : vector<8x96xf32>
    %117 = vector.extract_strided_slice %116 {offsets = [0, 0], sizes = [8, 32], strides = [1, 1]} : vector<8x96xf32> to vector<8x32xf32>
    %118 = vector.extract_strided_slice %116 {offsets = [0, 32], sizes = [8, 32], strides = [1, 1]} : vector<8x96xf32> to vector<8x32xf32>
    %119 = vector.extract_strided_slice %116 {offsets = [0, 64], sizes = [8, 32], strides = [1, 1]} : vector<8x96xf32> to vector<8x32xf32>
    %120 = vector.extract_strided_slice %110 {offsets = [0, 96], sizes = [8, 32], strides = [1, 1]} : vector<8x128xf32> to vector<8x32xf32>
    %121 = math.tanh %120 : vector<8x32xf32>
    %122 = arith.mulf %118, %105 : vector<8x32xf32>
    %123 = arith.mulf %117, %121 : vector<8x32xf32>
    %124 = arith.addf %122, %123 : vector<8x32xf32>
    %125 = math.tanh %124 : vector<8x32xf32>
    %126 = arith.mulf %119, %125 : vector<8x32xf32>
    %c0_58 = arith.constant 0 : index
    %c0_59 = arith.constant 0 : index
    %127 = vector.load %arg5[%c0_58, %c0_59] : memref<8x32xf32, #tpu.memory_space<vmem>>, vector<8x32xf32>
    tpu.vector_store %arg5[%c0_58, %c0_59], %124 {strides = array<i32>} : memref<8x32xf32, #tpu.memory_space<vmem>>, vector<8x32xf32>,
    %c0_60 = arith.constant 0 : index
    %c0_61 = arith.constant 0 : index
    %128 = vector.load %arg4[%c0_60, %c0_61] : memref<8x32xf32, #tpu.memory_space<vmem>>, vector<8x32xf32>
    tpu.vector_store %arg4[%c0_60, %c0_61], %126 {strides = array<i32>} : memref<8x32xf32, #tpu.memory_space<vmem>>, vector<8x32xf32>,
    %c5_i32 = arith.constant 5 : i32
    %c0_62 = arith.constant 0 : index
    %c0_63 = arith.constant 0 : index
    %129 = vector.load %arg4[%c0_62, %c0_63] : memref<8x32xf32, #tpu.memory_space<vmem>>, vector<8x32xf32>
    %c0_64 = arith.constant 0 : index
    %c0_65 = arith.constant 0 : index
    %130 = vector.load %arg5[%c0_64, %c0_65] : memref<8x32xf32, #tpu.memory_space<vmem>>, vector<8x32xf32>
    %131 = arith.index_cast %c5_i32 : i32 to index
    %c0_66 = arith.constant 0 : index
    %c0_67 = arith.constant 0 : index
    %132 = vector.load %arg1[%131, %c0_66, %c0_67] : memref<8x8x128xf32, #tpu.memory_space<vmem>>, vector<1x8x128xf32>
    %133 = vector.shape_cast %132 : vector<1x8x128xf32> to vector<8x128xf32>
    %cst_68 = arith.constant dense<0.000000e+00> : vector<8x128xf32>
    %134 = tpu.matmul %129, %3, %cst_68 {dimension_numbers = #tpu.dot_dimension_numbers<[1], [0], [0], [1], [0, 0, 1, 1], [], []>} : vector<8x32xf32>, vector<32x128xf32>, vector<8x128xf32> -> vector<8x128xf32>
    %135 = arith.addf %133, %134 : vector<8x128xf32>
    %136 = vector.extract_strided_slice %135 {offsets = [0, 0], sizes = [8, 96], strides = [1, 1]} : vector<8x128xf32> to vector<8x96xf32>
    %137 = arith.negf %136 : vector<8x96xf32>
    %138 = math.exp %137 : vector<8x96xf32>
    %cst_69 = arith.constant 1.000000e+00 : f32
    %139 = vector.broadcast %cst_69 : f32 to vector<8x96xf32>
    %140 = arith.addf %139, %138 : vector<8x96xf32>
    %141 = arith.divf %139, %140 : vector<8x96xf32>
    %142 = vector.extract_strided_slice %141 {offsets = [0, 0], sizes = [8, 32], strides = [1, 1]} : vector<8x96xf32> to vector<8x32xf32>
    %143 = vector.extract_strided_slice %141 {offsets = [0, 32], sizes = [8, 32], strides = [1, 1]} : vector<8x96xf32> to vector<8x32xf32>
    %144 = vector.extract_strided_slice %141 {offsets = [0, 64], sizes = [8, 32], strides = [1, 1]} : vector<8x96xf32> to vector<8x32xf32>
    %145 = vector.extract_strided_slice %135 {offsets = [0, 96], sizes = [8, 32], strides = [1, 1]} : vector<8x128xf32> to vector<8x32xf32>
    %146 = math.tanh %145 : vector<8x32xf32>
    %147 = arith.mulf %143, %130 : vector<8x32xf32>
    %148 = arith.mulf %142, %146 : vector<8x32xf32>
    %149 = arith.addf %147, %148 : vector<8x32xf32>
    %150 = math.tanh %149 : vector<8x32xf32>
    %151 = arith.mulf %144, %150 : vector<8x32xf32>
    %c0_70 = arith.constant 0 : index
    %c0_71 = arith.constant 0 : index
    %152 = vector.load %arg5[%c0_70, %c0_71] : memref<8x32xf32, #tpu.memory_space<vmem>>, vector<8x32xf32>
    tpu.vector_store %arg5[%c0_70, %c0_71], %149 {strides = array<i32>} : memref<8x32xf32, #tpu.memory_space<vmem>>, vector<8x32xf32>,
    %c0_72 = arith.constant 0 : index
    %c0_73 = arith.constant 0 : index
    %153 = vector.load %arg4[%c0_72, %c0_73] : memref<8x32xf32, #tpu.memory_space<vmem>>, vector<8x32xf32>
    tpu.vector_store %arg4[%c0_72, %c0_73], %151 {strides = array<i32>} : memref<8x32xf32, #tpu.memory_space<vmem>>, vector<8x32xf32>,
    %c6_i32 = arith.constant 6 : i32
    %c0_74 = arith.constant 0 : index
    %c0_75 = arith.constant 0 : index
    %154 = vector.load %arg4[%c0_74, %c0_75] : memref<8x32xf32, #tpu.memory_space<vmem>>, vector<8x32xf32>
    %c0_76 = arith.constant 0 : index
    %c0_77 = arith.constant 0 : index
    %155 = vector.load %arg5[%c0_76, %c0_77] : memref<8x32xf32, #tpu.memory_space<vmem>>, vector<8x32xf32>
    %156 = arith.index_cast %c6_i32 : i32 to index
    %c0_78 = arith.constant 0 : index
    %c0_79 = arith.constant 0 : index
    %157 = vector.load %arg1[%156, %c0_78, %c0_79] : memref<8x8x128xf32, #tpu.memory_space<vmem>>, vector<1x8x128xf32>
    %158 = vector.shape_cast %157 : vector<1x8x128xf32> to vector<8x128xf32>
    %cst_80 = arith.constant dense<0.000000e+00> : vector<8x128xf32>
    %159 = tpu.matmul %154, %3, %cst_80 {dimension_numbers = #tpu.dot_dimension_numbers<[1], [0], [0], [1], [0, 0, 1, 1], [], []>} : vector<8x32xf32>, vector<32x128xf32>, vector<8x128xf32> -> vector<8x128xf32>
    %160 = arith.addf %158, %159 : vector<8x128xf32>
    %161 = vector.extract_strided_slice %160 {offsets = [0, 0], sizes = [8, 96], strides = [1, 1]} : vector<8x128xf32> to vector<8x96xf32>
    %162 = arith.negf %161 : vector<8x96xf32>
    %163 = math.exp %162 : vector<8x96xf32>
    %cst_81 = arith.constant 1.000000e+00 : f32
    %164 = vector.broadcast %cst_81 : f32 to vector<8x96xf32>
    %165 = arith.addf %164, %163 : vector<8x96xf32>
    %166 = arith.divf %164, %165 : vector<8x96xf32>
    %167 = vector.extract_strided_slice %166 {offsets = [0, 0], sizes = [8, 32], strides = [1, 1]} : vector<8x96xf32> to vector<8x32xf32>
    %168 = vector.extract_strided_slice %166 {offsets = [0, 32], sizes = [8, 32], strides = [1, 1]} : vector<8x96xf32> to vector<8x32xf32>
    %169 = vector.extract_strided_slice %166 {offsets = [0, 64], sizes = [8, 32], strides = [1, 1]} : vector<8x96xf32> to vector<8x32xf32>
    %170 = vector.extract_strided_slice %160 {offsets = [0, 96], sizes = [8, 32], strides = [1, 1]} : vector<8x128xf32> to vector<8x32xf32>
    %171 = math.tanh %170 : vector<8x32xf32>
    %172 = arith.mulf %168, %155 : vector<8x32xf32>
    %173 = arith.mulf %167, %171 : vector<8x32xf32>
    %174 = arith.addf %172, %173 : vector<8x32xf32>
    %175 = math.tanh %174 : vector<8x32xf32>
    %176 = arith.mulf %169, %175 : vector<8x32xf32>
    %c0_82 = arith.constant 0 : index
    %c0_83 = arith.constant 0 : index
    %177 = vector.load %arg5[%c0_82, %c0_83] : memref<8x32xf32, #tpu.memory_space<vmem>>, vector<8x32xf32>
    tpu.vector_store %arg5[%c0_82, %c0_83], %174 {strides = array<i32>} : memref<8x32xf32, #tpu.memory_space<vmem>>, vector<8x32xf32>,
    %c0_84 = arith.constant 0 : index
    %c0_85 = arith.constant 0 : index
    %178 = vector.load %arg4[%c0_84, %c0_85] : memref<8x32xf32, #tpu.memory_space<vmem>>, vector<8x32xf32>
    tpu.vector_store %arg4[%c0_84, %c0_85], %176 {strides = array<i32>} : memref<8x32xf32, #tpu.memory_space<vmem>>, vector<8x32xf32>,
    %c7_i32 = arith.constant 7 : i32
    %c0_86 = arith.constant 0 : index
    %c0_87 = arith.constant 0 : index
    %179 = vector.load %arg4[%c0_86, %c0_87] : memref<8x32xf32, #tpu.memory_space<vmem>>, vector<8x32xf32>
    %c0_88 = arith.constant 0 : index
    %c0_89 = arith.constant 0 : index
    %180 = vector.load %arg5[%c0_88, %c0_89] : memref<8x32xf32, #tpu.memory_space<vmem>>, vector<8x32xf32>
    %181 = arith.index_cast %c7_i32 : i32 to index
    %c0_90 = arith.constant 0 : index
    %c0_91 = arith.constant 0 : index
    %182 = vector.load %arg1[%181, %c0_90, %c0_91] : memref<8x8x128xf32, #tpu.memory_space<vmem>>, vector<1x8x128xf32>
    %183 = vector.shape_cast %182 : vector<1x8x128xf32> to vector<8x128xf32>
    %cst_92 = arith.constant dense<0.000000e+00> : vector<8x128xf32>
    %184 = tpu.matmul %179, %3, %cst_92 {dimension_numbers = #tpu.dot_dimension_numbers<[1], [0], [0], [1], [0, 0, 1, 1], [], []>} : vector<8x32xf32>, vector<32x128xf32>, vector<8x128xf32> -> vector<8x128xf32>
    %185 = arith.addf %183, %184 : vector<8x128xf32>
    %186 = vector.extract_strided_slice %185 {offsets = [0, 0], sizes = [8, 96], strides = [1, 1]} : vector<8x128xf32> to vector<8x96xf32>
    %187 = arith.negf %186 : vector<8x96xf32>
    %188 = math.exp %187 : vector<8x96xf32>
    %cst_93 = arith.constant 1.000000e+00 : f32
    %189 = vector.broadcast %cst_93 : f32 to vector<8x96xf32>
    %190 = arith.addf %189, %188 : vector<8x96xf32>
    %191 = arith.divf %189, %190 : vector<8x96xf32>
    %192 = vector.extract_strided_slice %191 {offsets = [0, 0], sizes = [8, 32], strides = [1, 1]} : vector<8x96xf32> to vector<8x32xf32>
    %193 = vector.extract_strided_slice %191 {offsets = [0, 32], sizes = [8, 32], strides = [1, 1]} : vector<8x96xf32> to vector<8x32xf32>
    %194 = vector.extract_strided_slice %191 {offsets = [0, 64], sizes = [8, 32], strides = [1, 1]} : vector<8x96xf32> to vector<8x32xf32>
    %195 = vector.extract_strided_slice %185 {offsets = [0, 96], sizes = [8, 32], strides = [1, 1]} : vector<8x128xf32> to vector<8x32xf32>
    %196 = math.tanh %195 : vector<8x32xf32>
    %197 = arith.mulf %193, %180 : vector<8x32xf32>
    %198 = arith.mulf %192, %196 : vector<8x32xf32>
    %199 = arith.addf %197, %198 : vector<8x32xf32>
    %200 = math.tanh %199 : vector<8x32xf32>
    %201 = arith.mulf %194, %200 : vector<8x32xf32>
    %c0_94 = arith.constant 0 : index
    %c0_95 = arith.constant 0 : index
    %202 = vector.load %arg5[%c0_94, %c0_95] : memref<8x32xf32, #tpu.memory_space<vmem>>, vector<8x32xf32>
    tpu.vector_store %arg5[%c0_94, %c0_95], %199 {strides = array<i32>} : memref<8x32xf32, #tpu.memory_space<vmem>>, vector<8x32xf32>,
    %c0_96 = arith.constant 0 : index
    %c0_97 = arith.constant 0 : index
    %203 = vector.load %arg4[%c0_96, %c0_97] : memref<8x32xf32, #tpu.memory_space<vmem>>, vector<8x32xf32>
    tpu.vector_store %arg4[%c0_96, %c0_97], %201 {strides = array<i32>} : memref<8x32xf32, #tpu.memory_space<vmem>>, vector<8x32xf32>,
    %c8_i32 = arith.constant 8 : i32
    %c0_98 = arith.constant 0 : index
    %c0_99 = arith.constant 0 : index
    %204 = vector.load %arg4[%c0_98, %c0_99] : memref<8x32xf32, #tpu.memory_space<vmem>>, vector<8x32xf32>
    %c0_100 = arith.constant 0 : index
    %c0_101 = arith.constant 0 : index
    %205 = vector.load %arg3[%c0_100, %c0_101] : memref<8x32xf32, #tpu.memory_space<vmem>>, vector<8x32xf32>
    tpu.vector_store %arg3[%c0_100, %c0_101], %204 {strides = array<i32>} : memref<8x32xf32, #tpu.memory_space<vmem>>, vector<8x32xf32>,
    return
  }
  func.func @transform_0(%arg0: i32) -> (i32, i32, i32) {
    %c0_i32 = arith.constant 0 : i32
    %c0_i32_0 = arith.constant 0 : i32
    %c0_i32_1 = arith.constant 0 : i32
    return %arg0, %c0_i32, %c0_i32_0 : i32, i32, i32
  }
  func.func @transform_1(%arg0: i32) -> (i32, i32) {
    %c0_i32 = arith.constant 0 : i32
    %c0_i32_0 = arith.constant 0 : i32
    %c0_i32_1 = arith.constant 0 : i32
    return %c0_i32, %c0_i32_0 : i32, i32
  }
  func.func @transform_2(%arg0: i32) -> (i32, i32) {
    %c0_i32 = arith.constant 0 : i32
    %c0_i32_0 = arith.constant 0 : i32
    %c0_i32_1 = arith.constant 0 : i32
    return %c0_i32, %c0_i32_0 : i32, i32
  }
}

</mosaic_0001>

<llo_original>
// kernel: candle_lstm_pallas.1
$region0: #{candle_lstm_pallas.1}
  #allocation0 [shape = 'u32[]', space=smem, size = 0x4, offset = 0x4, fixed_abs, tag = 'smem constant byte address 0x4 - core index']
  #allocation1 [shape = 'u32[144,128]{1,0:T(1,128)}', space=vmem, size = 0x12000, scoped, tag = 'internal scratch']
  #allocation2 [shape = 'f32[8,32]{1,0:T(8,128)}', space=vmem, size = 0x1000, scoped, tag = 'scratch operand']
  #allocation3 [shape = 'f32[8,32]{1,0:T(8,128)}', space=vmem, size = 0x1000, scoped, tag = 'scratch operand']
  %s0 = inlined_call_operand.vmem [shape: f32[8,8,128], index: 0, kind: input, shape index: {}]
  %s1 = inlined_call_operand.vmem [shape: f32[32,128], index: 1, kind: input, shape index: {}]
  %s2 = inlined_call_operand.vmem [shape: f32[8,32], index: 2, kind: output, shape index: {}]
  %s3 = sld [smem:[#allocation0]]
  $region22: #{candle_lstm_pallas.1} parent=0
    _
  %s5 = ssub.s32 1, %s3
  %s6 = scalar_select 0, %s5, %s3
  // Predicated region
  $region2: #{candle_lstm_pallas.1} parent=0 // pred_check
    _
  $region3: #{candle_lstm_pallas.1} parent=0 // pred_check_branch
    %8 = sbr.rel (0) target = $region5
  $region4: #{candle_lstm_pallas.1} parent=0 // pred_region
    _
  $region5: #{candle_lstm_pallas.1} parent=0 // pred_fallthru
    _
  // Predicated region
  $region6: #{candle_lstm_pallas.1} parent=0 // pred_check
    _
  $region7: #{candle_lstm_pallas.1} parent=0 // pred_check_branch
    %10 = sbr.rel (0) target = $region9
  $region8: #{candle_lstm_pallas.1} parent=0 // pred_region
    _
  $region9: #{candle_lstm_pallas.1} parent=0 // pred_fallthru
    _
  %p11 = scmp.eq.s32.totalorder 0, 0
  // Predicated region
  $region10: #{candle_lstm_pallas.1} parent=0 // pred_check
    %p12 = pneg %p11
  $region11: #{candle_lstm_pallas.1} parent=0 // pred_check_branch
    %14 = sbr.rel (%p12) target = $region13
  $region12: #{candle_lstm_pallas.1} parent=0 // pred_region
    %vm15 = vcmask 261120
    %16 = vst.msk [vmem:[#allocation2] sm:$0xff] %vm15, 0.0
    %17 = vst.msk [vmem:[#allocation3] sm:$0xff] %vm15, 0.0
  $region13: #{candle_lstm_pallas.1} parent=0 // pred_fallthru
    _
  %v18 = vld [vmem:[%s1] sm:$0xff]
  %v19 = vld [vmem:[%s1 + $0x8] sm:$0xff]
  %v20 = vld [vmem:[%s1 + $0x10] sm:$0xff]
  %v21 = vld [vmem:[%s1 + $0x18] sm:$0xff]
  %v22 = vld [vmem:[#allocation2] sm:$0xff]
  %v23 = vld [vmem:[#allocation3] sm:$0xff]
  %v24 = vld [vmem:[%s0] sm:$0xff]
  %vm25 = vcmask 261120
  %v27 = vsel %vm25, %v22, 0
  %29 = vmatprep.subr.mxu0 0.0
  %30 = vmatpush1.msra.mxu0 0.0
  %31 = vmatprep.subr.mxu0 0.0
  %32 = vmatpush1.msra.mxu0 0.0
  %33 = vmatprep.subr.mxu0 0.0
  %34 = vmatpush1.msra.mxu0 0.0
  %35 = vmatprep.subr.mxu0 0.0
  %36 = vmatpush1.msra.mxu0 0.0
  %37 = vmatprep.subr.mxu0 0.0
  %38 = vmatpush1.msra.mxu0 0.0
  %39 = vmatprep.subr.mxu0 0.0
  %40 = vmatpush1.msra.mxu0 0.0
  %41 = vmatprep.subr.mxu0 0.0
  %42 = vmatpush1.msra.mxu0 0.0
  %43 = vmatprep.subr.mxu0 0.0
  %44 = vmatpush1.msra.mxu0 0.0
  %45 = vmatprep.subr.mxu0 0.0
  %46 = vmatpush1.msra.mxu0 0.0
  %47 = vmatprep.subr.mxu0 0.0
  %48 = vmatpush1.msra.mxu0 0.0
  %49 = vmatprep.subr.mxu0 0.0
  %50 = vmatpush1.msra.mxu0 0.0
  %51 = vmatprep.subr.mxu0 0.0
  %52 = vmatpush1.msra.mxu0 0.0
  %53 = vmatprep.subr.mxu0 0.0
  %54 = vmatpush1.msra.mxu0 %v21
  %55 = vmatprep.subr.mxu0 0.0
  %56 = vmatpush1.msra.mxu0 %v20
  %57 = vmatprep.subr.mxu0 0.0
  %58 = vmatpush1.msra.mxu0 %v19
  %59 = vmatprep.subr.mxu0 0.0
  %60 = vmatpush1.msra.mxu0 %v18
  %61 = vmatprep.subr.mxu0 0.0
  %62 = vmatpush2.msra.mxu0 0.0
  %63 = vmatprep.subr.mxu0 0.0
  %64 = vmatpush2.msra.mxu0 0.0
  %65 = vmatprep.subr.mxu0 0.0
  %66 = vmatpush2.msra.mxu0 0.0
  %67 = vmatprep.subr.mxu0 0.0
  %68 = vmatpush2.msra.mxu0 0.0
  %69 = vmatprep.subr.mxu0 0.0
  %70 = vmatpush2.msra.mxu0 0.0
  %71 = vmatprep.subr.mxu0 0.0
  %72 = vmatpush2.msra.mxu0 0.0
  %73 = vmatprep.subr.mxu0 0.0
  %74 = vmatpush2.msra.mxu0 0.0
  %75 = vmatprep.subr.mxu0 0.0
  %76 = vmatpush2.msra.mxu0 0.0
  %77 = vmatprep.subr.mxu0 0.0
  %78 = vmatpush2.msra.mxu0 0.0
  %79 = vmatprep.subr.mxu0 0.0
  %80 = vmatpush2.msra.mxu0 0.0
  %81 = vmatprep.subr.mxu0 0.0
  %82 = vmatpush2.msra.mxu0 0.0
  %83 = vmatprep.subr.mxu0 0.0
  %84 = vmatpush2.msra.mxu0 0.0
  %85 = vmatprep.subr.mxu0 0.0
  %86 = vmatpush2.msra.mxu0 0.0
  %87 = vmatprep.subr.mxu0 0.0
  %88 = vmatpush2.msra.mxu0 0.0
  %89 = vmatprep.subr.mxu0 0.0
  %90 = vmatpush2.msra.mxu0 0.0
  %91 = vmatprep.subr.mxu0 0.0
  %92 = vmatpush2.msra.mxu0 0.0
  %93 = vmatprep.mubr.f32.mxu0 0.0
  %94 = vmatmul.mubr.f32.gmra.mxu0 %v27
  %v95 = vpop.f32.mrf.mxu0
  %v96 = vadd.f32 0.0, %v95
  %v97 = vpop.f32.mrf.mxu0
  %98 = vdwg.mxu0
  %v99 = vadd.f32 %v24, %v96
  %v100 = vxor.u32 %v99, 2147483648
  %v101 = vmul.f32 %v100, 1.442695
  %v102 = vpow.pop %v101
  %v103 = vadd.f32 %v102, 1.0
  %v104 = vrcp.pop %v103
  %v105 = vmul.f32 1.0, %v104
  %v106 = vtanh.pop %v99
  %108 = vrot.lane.b32.xlu0 %v23, 32
  %v109 = vpop.permute.xlu0 %108
  %v111 = vmul.f32 %v105, %v109
  %113 = vrot.lane.b32.xlu0 %v106, 32
  %v114 = vpop.permute.xlu0 %113
  %v116 = vmul.f32 %v105, %v114
  %118 = vrot.lane.b32.xlu0 %v116, 32
  %v119 = vpop.permute.xlu0 %118
  %v121 = vadd.f32 %v111, %v119
  %v122 = vtanh.pop %v121
  %124 = vrot.lane.b32.xlu0 %v122, 32
  %v125 = vpop.permute.xlu0 %124
  %v127 = vmul.f32 %v105, %v125
  %129 = vrot.lane.b32.xlu0 %v121, 96
  %v130 = vpop.permute.xlu0 %129
  %132 = vst.msk [vmem:[#allocation3] sm:$0xff] %vm25, %v130
  %134 = vrot.lane.b32.xlu0 %v127, 64
  %v135 = vpop.permute.xlu0 %134
  %137 = vst.msk [vmem:[#allocation2] sm:$0xff] %vm25, %v135
  %v138 = vld [vmem:[#allocation2] sm:$0xff]
  %v139 = vld [vmem:[#allocation3] sm:$0xff]
  %s140 = scalar_lea.vmem %s0, 8
  %v141 = vld [vmem:[%s140] sm:$0xff]
  %v143 = vsel %vm25, %v138, 0
  %145 = vmatprep.subr.mxu0 0.0
  %146 = vmatpush1.msra.mxu0 0.0
  %147 = vmatprep.subr.mxu0 0.0
  %148 = vmatpush1.msra.mxu0 0.0
  %149 = vmatprep.subr.mxu0 0.0
  %150 = vmatpush1.msra.mxu0 0.0
  %151 = vmatprep.subr.mxu0 0.0
  %152 = vmatpush1.msra.mxu0 0.0
  %153 = vmatprep.subr.mxu0 0.0
  %154 = vmatpush1.msra.mxu0 0.0
  %155 = vmatprep.subr.mxu0 0.0
  %156 = vmatpush1.msra.mxu0 0.0
  %157 = vmatprep.subr.mxu0 0.0
  %158 = vmatpush1.msra.mxu0 0.0
  %159 = vmatprep.subr.mxu0 0.0
  %160 = vmatpush1.msra.mxu0 0.0
  %161 = vmatprep.subr.mxu0 0.0
  %162 = vmatpush1.msra.mxu0 0.0
  %163 = vmatprep.subr.mxu0 0.0
  %164 = vmatpush1.msra.mxu0 0.0
  %165 = vmatprep.subr.mxu0 0.0
  %166 = vmatpush1.msra.mxu0 0.0
  %167 = vmatprep.subr.mxu0 0.0
  %168 = vmatpush1.msra.mxu0 0.0
  %169 = vmatprep.subr.mxu0 0.0
  %170 = vmatpush1.msra.mxu0 %v21
  %171 = vmatprep.subr.mxu0 0.0
  %172 = vmatpush1.msra.mxu0 %v20
  %173 = vmatprep.subr.mxu0 0.0
  %174 = vmatpush1.msra.mxu0 %v19
  %175 = vmatprep.subr.mxu0 0.0
  %176 = vmatpush1.msra.mxu0 %v18
  %177 = vmatprep.subr.mxu0 0.0
  %178 = vmatpush2.msra.mxu0 0.0
  %179 = vmatprep.subr.mxu0 0.0
  %180 = vmatpush2.msra.mxu0 0.0
  %181 = vmatprep.subr.mxu0 0.0
  %182 = vmatpush2.msra.mxu0 0.0
  %183 = vmatprep.subr.mxu0 0.0
  %184 = vmatpush2.msra.mxu0 0.0
  %185 = vmatprep.subr.mxu0 0.0
  %186 = vmatpush2.msra.mxu0 0.0
  %187 = vmatprep.subr.mxu0 0.0
  %188 = vmatpush2.msra.mxu0 0.0
  %189 = vmatprep.subr.mxu0 0.0
  %190 = vmatpush2.msra.mxu0 0.0
  %191 = vmatprep.subr.mxu0 0.0
  %192 = vmatpush2.msra.mxu0 0.0
  %193 = vmatprep.subr.mxu0 0.0
  %194 = vmatpush2.msra.mxu0 0.0
  %195 = vmatprep.subr.mxu0 0.0
  %196 = vmatpush2.msra.mxu0 0.0
  %197 = vmatprep.subr.mxu0 0.0
  %198 = vmatpush2.msra.mxu0 0.0
  %199 = vmatprep.subr.mxu0 0.0
  %200 = vmatpush2.msra.mxu0 0.0
  %201 = vmatprep.subr.mxu0 0.0
  %202 = vmatpush2.msra.mxu0 0.0
  %203 = vmatprep.subr.mxu0 0.0
  %204 = vmatpush2.msra.mxu0 0.0
  %205 = vmatprep.subr.mxu0 0.0
  %206 = vmatpush2.msra.mxu0 0.0
  %207 = vmatprep.subr.mxu0 0.0
  %208 = vmatpush2.msra.mxu0 0.0
  %209 = vmatprep.mubr.f32.mxu0 0.0
  %210 = vmatmul.mubr.f32.gmra.mxu0 %v143
  %v211 = vpop.f32.mrf.mxu0
  %v212 = vadd.f32 0.0, %v211
  %v213 = vpop.f32.mrf.mxu0
  %214 = vdwg.mxu0
  %v215 = vadd.f32 %v141, %v212
  %v216 = vxor.u32 %v215, 2147483648
  %v217 = vmul.f32 %v216, 1.442695
  %v218 = vpow.pop %v217
  %v219 = vadd.f32 %v218, 1.0
  %v220 = vrcp.pop %v219
  %v221 = vmul.f32 1.0, %v220
  %v222 = vtanh.pop %v215
  %224 = vrot.lane.b32.xlu0 %v139, 32
  %v225 = vpop.permute.xlu0 %224
  %v227 = vmul.f32 %v221, %v225
  %229 = vrot.lane.b32.xlu0 %v222, 32
  %v230 = vpop.permute.xlu0 %229
  %v232 = vmul.f32 %v221, %v230
  %234 = vrot.lane.b32.xlu0 %v232, 32
  %v235 = vpop.permute.xlu0 %234
  %v237 = vadd.f32 %v227, %v235
  %v238 = vtanh.pop %v237
  %240 = vrot.lane.b32.xlu0 %v238, 32
  %v241 = vpop.permute.xlu0 %240
  %v243 = vmul.f32 %v221, %v241
  %245 = vrot.lane.b32.xlu0 %v237, 96
  %v246 = vpop.permute.xlu0 %245
  %248 = vst.msk [vmem:[#allocation3] sm:$0xff] %vm25, %v246
  %250 = vrot.lane.b32.xlu0 %v243, 64
  %v251 = vpop.permute.xlu0 %250
  %253 = vst.msk [vmem:[#allocation2] sm:$0xff] %vm25, %v251
  %v254 = vld [vmem:[#allocation2] sm:$0xff]
  %v255 = vld [vmem:[#allocation3] sm:$0xff]
  %s256 = scalar_lea.vmem %s0, 16
  %v257 = vld [vmem:[%s256] sm:$0xff]
  %v259 = vsel %vm25, %v254, 0
  %261 = vmatprep.subr.mxu0 0.0
  %262 = vmatpush1.msra.mxu0 0.0
  %263 = vmatprep.subr.mxu0 0.0
  %264 = vmatpush1.msra.mxu0 0.0
  %265 = vmatprep.subr.mxu0 0.0
  %266 = vmatpush1.msra.mxu0 0.0
  %267 = vmatprep.subr.mxu0 0.0
  %268 = vmatpush1.msra.mxu0 0.0
  %269 = vmatprep.subr.mxu0 0.0
  %270 = vmatpush1.msra.mxu0 0.0
  %271 = vmatprep.subr.mxu0 0.0
  %272 = vmatpush1.msra.mxu0 0.0
  %273 = vmatprep.subr.mxu0 0.0
  %274 = vmatpush1.msra.mxu0 0.0
  %275 = vmatprep.subr.mxu0 0.0
  %276 = vmatpush1.msra.mxu0 0.0
  %277 = vmatprep.subr.mxu0 0.0
  %278 = vmatpush1.msra.mxu0 0.0
  %279 = vmatprep.subr.mxu0 0.0
  %280 = vmatpush1.msra.mxu0 0.0
  %281 = vmatprep.subr.mxu0 0.0
  %282 = vmatpush1.msra.mxu0 0.0
  %283 = vmatprep.subr.mxu0 0.0
  %284 = vmatpush1.msra.mxu0 0.0
  %285 = vmatprep.subr.mxu0 0.0
  %286 = vmatpush1.msra.mxu0 %v21
  %287 = vmatprep.subr.mxu0 0.0
  %288 = vmatpush1.msra.mxu0 %v20
  %289 = vmatprep.subr.mxu0 0.0
  %290 = vmatpush1.msra.mxu0 %v19
  %291 = vmatprep.subr.mxu0 0.0
  %292 = vmatpush1.msra.mxu0 %v18
  %293 = vmatprep.subr.mxu0 0.0
  %294 = vmatpush2.msra.mxu0 0.0
  %295 = vmatprep.subr.mxu0 0.0
  %296 = vmatpush2.msra.mxu0 0.0
  %297 = vmatprep.subr.mxu0 0.0
  %298 = vmatpush2.msra.mxu0 0.0
  %299 = vmatprep.subr.mxu0 0.0
  %300 = vmatpush2.msra.mxu0 0.0
  %301 = vmatprep.subr.mxu0 0.0
  %302 = vmatpush2.msra.mxu0 0.0
  %303 = vmatprep.subr.mxu0 0.0
  %304 = vmatpush2.msra.mxu0 0.0
  %305 = vmatprep.subr.mxu0 0.0
  %306 = vmatpush2.msra.mxu0 0.0
  %307 = vmatprep.subr.mxu0 0.0
  %308 = vmatpush2.msra.mxu0 0.0
  %309 = vmatprep.subr.mxu0 0.0
  %310 = vmatpush2.msra.mxu0 0.0
  %311 = vmatprep.subr.mxu0 0.0
  %312 = vmatpush2.msra.mxu0 0.0
  %313 = vmatprep.subr.mxu0 0.0
  %314 = vmatpush2.msra.mxu0 0.0
  %315 = vmatprep.subr.mxu0 0.0
  %316 = vmatpush2.msra.mxu0 0.0
  %317 = vmatprep.subr.mxu0 0.0
  %318 = vmatpush2.msra.mxu0 0.0
  %319 = vmatprep.subr.mxu0 0.0
  %320 = vmatpush2.msra.mxu0 0.0
  %321 = vmatprep.subr.mxu0 0.0
  %322 = vmatpush2.msra.mxu0 0.0
  %323 = vmatprep.subr.mxu0 0.0
  %324 = vmatpush2.msra.mxu0 0.0
  %325 = vmatprep.mubr.f32.mxu0 0.0
  %326 = vmatmul.mubr.f32.gmra.mxu0 %v259
  %v327 = vpop.f32.mrf.mxu0
  %v328 = vadd.f32 0.0, %v327
  %v329 = vpop.f32.mrf.mxu0
  %330 = vdwg.mxu0
  %v331 = vadd.f32 %v257, %v328
  %v332 = vxor.u32 %v331, 2147483648
  %v333 = vmul.f32 %v332, 1.442695
  %v334 = vpow.pop %v333
  %v335 = vadd.f32 %v334, 1.0
  %v336 = vrcp.pop %v335
  %v337 = vmul.f32 1.0, %v336
  %v338 = vtanh.pop %v331
  %340 = vrot.lane.b32.xlu0 %v255, 32
  %v341 = vpop.permute.xlu0 %340
  %v343 = vmul.f32 %v337, %v341
  %345 = vrot.lane.b32.xlu0 %v338, 32
  %v346 = vpop.permute.xlu0 %345
  %v348 = vmul.f32 %v337, %v346
  %350 = vrot.lane.b32.xlu0 %v348, 32
  %v351 = vpop.permute.xlu0 %350
  %v353 = vadd.f32 %v343, %v351
  %v354 = vtanh.pop %v353
  %356 = vrot.lane.b32.xlu0 %v354, 32
  %v357 = vpop.permute.xlu0 %356
  %v359 = vmul.f32 %v337, %v357
  %361 = vrot.lane.b32.xlu0 %v353, 96
  %v362 = vpop.permute.xlu0 %361
  %364 = vst.msk [vmem:[#allocation3] sm:$0xff] %vm25, %v362
  %366 = vrot.lane.b32.xlu0 %v359, 64
  %v367 = vpop.permute.xlu0 %366
  %369 = vst.msk [vmem:[#allocation2] sm:$0xff] %vm25, %v367
  %v370 = vld [vmem:[#allocation2] sm:$0xff]
  %v371 = vld [vmem:[#allocation3] sm:$0xff]
  %s372 = scalar_lea.vmem %s0, 24
  %v373 = vld [vmem:[%s372] sm:$0xff]
  %v375 = vsel %vm25, %v370, 0
  %377 = vmatprep.subr.mxu0 0.0
  %378 = vmatpush1.msra.mxu0 0.0
  %379 = vmatprep.subr.mxu0 0.0
  %380 = vmatpush1.msra.mxu0 0.0
  %381 = vmatprep.subr.mxu0 0.0
  %382 = vmatpush1.msra.mxu0 0.0
  %383 = vmatprep.subr.mxu0 0.0
  %384 = vmatpush1.msra.mxu0 0.0
  %385 = vmatprep.subr.mxu0 0.0
  %386 = vmatpush1.msra.mxu0 0.0
  %387 = vmatprep.subr.mxu0 0.0
  %388 = vmatpush1.msra.mxu0 0.0
  %389 = vmatprep.subr.mxu0 0.0
  %390 = vmatpush1.msra.mxu0 0.0
  %391 = vmatprep.subr.mxu0 0.0
  %392 = vmatpush1.msra.mxu0 0.0
  %393 = vmatprep.subr.mxu0 0.0
  %394 = vmatpush1.msra.mxu0 0.0
  %395 = vmatprep.subr.mxu0 0.0
  %396 = vmatpush1.msra.mxu0 0.0
  %397 = vmatprep.subr.mxu0 0.0
  %398 = vmatpush1.msra.mxu0 0.0
  %399 = vmatprep.subr.mxu0 0.0
  %400 = vmatpush1.msra.mxu0 0.0
  %401 = vmatprep.subr.mxu0 0.0
  %402 = vmatpush1.msra.mxu0 %v21
  %403 = vmatprep.subr.mxu0 0.0
  %404 = vmatpush1.msra.mxu0 %v20
  %405 = vmatprep.subr.mxu0 0.0
  %406 = vmatpush1.msra.mxu0 %v19
  %407 = vmatprep.subr.mxu0 0.0
  %408 = vmatpush1.msra.mxu0 %v18
  %409 = vmatprep.subr.mxu0 0.0
  %410 = vmatpush2.msra.mxu0 0.0
  %411 = vmatprep.subr.mxu0 0.0
  %412 = vmatpush2.msra.mxu0 0.0
  %413 = vmatprep.subr.mxu0 0.0
  %414 = vmatpush2.msra.mxu0 0.0
  %415 = vmatprep.subr.mxu0 0.0
  %416 = vmatpush2.msra.mxu0 0.0
  %417 = vmatprep.subr.mxu0 0.0
  %418 = vmatpush2.msra.mxu0 0.0
  %419 = vmatprep.subr.mxu0 0.0
  %420 = vmatpush2.msra.mxu0 0.0
  %421 = vmatprep.subr.mxu0 0.0
  %422 = vmatpush2.msra.mxu0 0.0
  %423 = vmatprep.subr.mxu0 0.0
  %424 = vmatpush2.msra.mxu0 0.0
  %425 = vmatprep.subr.mxu0 0.0
  %426 = vmatpush2.msra.mxu0 0.0
  %427 = vmatprep.subr.mxu0 0.0
  %428 = vmatpush2.msra.mxu0 0.0
  %429 = vmatprep.subr.mxu0 0.0
  %430 = vmatpush2.msra.mxu0 0.0
  %431 = vmatprep.subr.mxu0 0.0
  %432 = vmatpush2.msra.mxu0 0.0
  %433 = vmatprep.subr.mxu0 0.0
  %434 = vmatpush2.msra.mxu0 0.0
  %435 = vmatprep.subr.mxu0 0.0
  %436 = vmatpush2.msra.mxu0 0.0
  %437 = vmatprep.subr.mxu0 0.0
  %438 = vmatpush2.msra.mxu0 0.0
  %439 = vmatprep.subr.mxu0 0.0
  %440 = vmatpush2.msra.mxu0 0.0
  %441 = vmatprep.mubr.f32.mxu0 0.0
  %442 = vmatmul.mubr.f32.gmra.mxu0 %v375
  %v443 = vpop.f32.mrf.mxu0
  %v444 = vadd.f32 0.0, %v443
  %v445 = vpop.f32.mrf.mxu0
  %446 = vdwg.mxu0
  %v447 = vadd.f32 %v373, %v444
  %v448 = vxor.u32 %v447, 2147483648
  %v449 = vmul.f32 %v448, 1.442695
  %v450 = vpow.pop %v449
  %v451 = vadd.f32 %v450, 1.0
  %v452 = vrcp.pop %v451
  %v453 = vmul.f32 1.0, %v452
  %v454 = vtanh.pop %v447
  %456 = vrot.lane.b32.xlu0 %v371, 32
  %v457 = vpop.permute.xlu0 %456
  %v459 = vmul.f32 %v453, %v457
  %461 = vrot.lane.b32.xlu0 %v454, 32
  %v462 = vpop.permute.xlu0 %461
  %v464 = vmul.f32 %v453, %v462
  %466 = vrot.lane.b32.xlu0 %v464, 32
  %v467 = vpop.permute.xlu0 %466
  %v469 = vadd.f32 %v459, %v467
  %v470 = vtanh.pop %v469
  %472 = vrot.lane.b32.xlu0 %v470, 32
  %v473 = vpop.permute.xlu0 %472
  %v475 = vmul.f32 %v453, %v473
  %477 = vrot.lane.b32.xlu0 %v469, 96
  %v478 = vpop.permute.xlu0 %477
  %480 = vst.msk [vmem:[#allocation3] sm:$0xff] %vm25, %v478
  %482 = vrot.lane.b32.xlu0 %v475, 64
  %v483 = vpop.permute.xlu0 %482
  %485 = vst.msk [vmem:[#allocation2] sm:$0xff] %vm25, %v483
  %v486 = vld [vmem:[#allocation2] sm:$0xff]
  %v487 = vld [vmem:[#allocation3] sm:$0xff]
  %s488 = scalar_lea.vmem %s0, 32
  %v489 = vld [vmem:[%s488] sm:$0xff]
  %v491 = vsel %vm25, %v486, 0
  %493 = vmatprep.subr.mxu0 0.0
  %494 = vmatpush1.msra.mxu0 0.0
  %495 = vmatprep.subr.mxu0 0.0
  %496 = vmatpush1.msra.mxu0 0.0
  %497 = vmatprep.subr.mxu0 0.0
  %498 = vmatpush1.msra.mxu0 0.0
  %499 = vmatprep.subr.mxu0 0.0
  %500 = vmatpush1.msra.mxu0 0.0
  %501 = vmatprep.subr.mxu0 0.0
  %502 = vmatpush1.msra.mxu0 0.0
  %503 = vmatprep.subr.mxu0 0.0
  %504 = vmatpush1.msra.mxu0 0.0
  %505 = vmatprep.subr.mxu0 0.0
  %506 = vmatpush1.msra.mxu0 0.0
  %507 = vmatprep.subr.mxu0 0.0
  %508 = vmatpush1.msra.mxu0 0.0
  %509 = vmatprep.subr.mxu0 0.0
  %510 = vmatpush1.msra.mxu0 0.0
  %511 = vmatprep.subr.mxu0 0.0
  %512 = vmatpush1.msra.mxu0 0.0
  %513 = vmatprep.subr.mxu0 0.0
  %514 = vmatpush1.msra.mxu0 0.0
  %515 = vmatprep.subr.mxu0 0.0
  %516 = vmatpush1.msra.mxu0 0.0
  %517 = vmatprep.subr.mxu0 0.0
  %518 = vmatpush1.msra.mxu0 %v21
  %519 = vmatprep.subr.mxu0 0.0
  %520 = vmatpush1.msra.mxu0 %v20
  %521 = vmatprep.subr.mxu0 0.0
  %522 = vmatpush1.msra.mxu0 %v19
  %523 = vmatprep.subr.mxu0 0.0
  %524 = vmatpush1.msra.mxu0 %v18
  %525 = vmatprep.subr.mxu0 0.0
  %526 = vmatpush2.msra.mxu0 0.0
  %527 = vmatprep.subr.mxu0 0.0
  %528 = vmatpush2.msra.mxu0 0.0
  %529 = vmatprep.subr.mxu0 0.0
  %530 = vmatpush2.msra.mxu0 0.0
  %531 = vmatprep.subr.mxu0 0.0
  %532 = vmatpush2.msra.mxu0 0.0
  %533 = vmatprep.subr.mxu0 0.0
  %534 = vmatpush2.msra.mxu0 0.0
  %535 = vmatprep.subr.mxu0 0.0
  %536 = vmatpush2.msra.mxu0 0.0
  %537 = vmatprep.subr.mxu0 0.0
  %538 = vmatpush2.msra.mxu0 0.0
  %539 = vmatprep.subr.mxu0 0.0
  %540 = vmatpush2.msra.mxu0 0.0
  %541 = vmatprep.subr.mxu0 0.0
  %542 = vmatpush2.msra.mxu0 0.0
  %543 = vmatprep.subr.mxu0 0.0
  %544 = vmatpush2.msra.mxu0 0.0
  %545 = vmatprep.subr.mxu0 0.0
  %546 = vmatpush2.msra.mxu0 0.0
  %547 = vmatprep.subr.mxu0 0.0
  %548 = vmatpush2.msra.mxu0 0.0
  %549 = vmatprep.subr.mxu0 0.0
  %550 = vmatpush2.msra.mxu0 0.0
  %551 = vmatprep.subr.mxu0 0.0
  %552 = vmatpush2.msra.mxu0 0.0
  %553 = vmatprep.subr.mxu0 0.0
  %554 = vmatpush2.msra.mxu0 0.0
  %555 = vmatprep.subr.mxu0 0.0
  %556 = vmatpush2.msra.mxu0 0.0
  %557 = vmatprep.mubr.f32.mxu0 0.0
  %558 = vmatmul.mubr.f32.gmra.mxu0 %v491
  %v559 = vpop.f32.mrf.mxu0
  %v560 = vadd.f32 0.0, %v559
  %v561 = vpop.f32.mrf.mxu0
  %562 = vdwg.mxu0
  %v563 = vadd.f32 %v489, %v560
  %v564 = vxor.u32 %v563, 2147483648
  %v565 = vmul.f32 %v564, 1.442695
  %v566 = vpow.pop %v565
  %v567 = vadd.f32 %v566, 1.0
  %v568 = vrcp.pop %v567
  %v569 = vmul.f32 1.0, %v568
  %v570 = vtanh.pop %v563
  %572 = vrot.lane.b32.xlu0 %v487, 32
  %v573 = vpop.permute.xlu0 %572
  %v575 = vmul.f32 %v569, %v573
  %577 = vrot.lane.b32.xlu0 %v570, 32
  %v578 = vpop.permute.xlu0 %577
  %v580 = vmul.f32 %v569, %v578
  %582 = vrot.lane.b32.xlu0 %v580, 32
  %v583 = vpop.permute.xlu0 %582
  %v585 = vadd.f32 %v575, %v583
  %v586 = vtanh.pop %v585
  %588 = vrot.lane.b32.xlu0 %v586, 32
  %v589 = vpop.permute.xlu0 %588
  %v591 = vmul.f32 %v569, %v589
  %593 = vrot.lane.b32.xlu0 %v585, 96
  %v594 = vpop.permute.xlu0 %593
  %596 = vst.msk [vmem:[#allocation3] sm:$0xff] %vm25, %v594
  %598 = vrot.lane.b32.xlu0 %v591, 64
  %v599 = vpop.permute.xlu0 %598
  %601 = vst.msk [vmem:[#allocation2] sm:$0xff] %vm25, %v599
  %v602 = vld [vmem:[#allocation2] sm:$0xff]
  %v603 = vld [vmem:[#allocation3] sm:$0xff]
  %s604 = scalar_lea.vmem %s0, 40
  %v605 = vld [vmem:[%s604] sm:$0xff]
  %v607 = vsel %vm25, %v602, 0
  %609 = vmatprep.subr.mxu0 0.0
  %610 = vmatpush1.msra.mxu0 0.0
  %611 = vmatprep.subr.mxu0 0.0
  %612 = vmatpush1.msra.mxu0 0.0
  %613 = vmatprep.subr.mxu0 0.0
  %614 = vmatpush1.msra.mxu0 0.0
  %615 = vmatprep.subr.mxu0 0.0
  %616 = vmatpush1.msra.mxu0 0.0
  %617 = vmatprep.subr.mxu0 0.0
  %618 = vmatpush1.msra.mxu0 0.0
  %619 = vmatprep.subr.mxu0 0.0
  %620 = vmatpush1.msra.mxu0 0.0
  %621 = vmatprep.subr.mxu0 0.0
  %622 = vmatpush1.msra.mxu0 0.0
  %623 = vmatprep.subr.mxu0 0.0
  %624 = vmatpush1.msra.mxu0 0.0
  %625 = vmatprep.subr.mxu0 0.0
  %626 = vmatpush1.msra.mxu0 0.0
  %627 = vmatprep.subr.mxu0 0.0
  %628 = vmatpush1.msra.mxu0 0.0
  %629 = vmatprep.subr.mxu0 0.0
  %630 = vmatpush1.msra.mxu0 0.0
  %631 = vmatprep.subr.mxu0 0.0
  %632 = vmatpush1.msra.mxu0 0.0
  %633 = vmatprep.subr.mxu0 0.0
  %634 = vmatpush1.msra.mxu0 %v21
  %635 = vmatprep.subr.mxu0 0.0
  %636 = vmatpush1.msra.mxu0 %v20
  %637 = vmatprep.subr.mxu0 0.0
  %638 = vmatpush1.msra.mxu0 %v19
  %639 = vmatprep.subr.mxu0 0.0
  %640 = vmatpush1.msra.mxu0 %v18
  %641 = vmatprep.subr.mxu0 0.0
  %642 = vmatpush2.msra.mxu0 0.0
  %643 = vmatprep.subr.mxu0 0.0
  %644 = vmatpush2.msra.mxu0 0.0
  %645 = vmatprep.subr.mxu0 0.0
  %646 = vmatpush2.msra.mxu0 0.0
  %647 = vmatprep.subr.mxu0 0.0
  %648 = vmatpush2.msra.mxu0 0.0
  %649 = vmatprep.subr.mxu0 0.0
  %650 = vmatpush2.msra.mxu0 0.0
  %651 = vmatprep.subr.mxu0 0.0
  %652 = vmatpush2.msra.mxu0 0.0
  %653 = vmatprep.subr.mxu0 0.0
  %654 = vmatpush2.msra.mxu0 0.0
  %655 = vmatprep.subr.mxu0 0.0
  %656 = vmatpush2.msra.mxu0 0.0
  %657 = vmatprep.subr.mxu0 0.0
  %658 = vmatpush2.msra.mxu0 0.0
  %659 = vmatprep.subr.mxu0 0.0
  %660 = vmatpush2.msra.mxu0 0.0
  %661 = vmatprep.subr.mxu0 0.0
  %662 = vmatpush2.msra.mxu0 0.0
  %663 = vmatprep.subr.mxu0 0.0
  %664 = vmatpush2.msra.mxu0 0.0
  %665 = vmatprep.subr.mxu0 0.0
  %666 = vmatpush2.msra.mxu0 0.0
  %667 = vmatprep.subr.mxu0 0.0
  %668 = vmatpush2.msra.mxu0 0.0
  %669 = vmatprep.subr.mxu0 0.0
  %670 = vmatpush2.msra.mxu0 0.0
  %671 = vmatprep.subr.mxu0 0.0
  %672 = vmatpush2.msra.mxu0 0.0
  %673 = vmatprep.mubr.f32.mxu0 0.0
  %674 = vmatmul.mubr.f32.gmra.mxu0 %v607
  %v675 = vpop.f32.mrf.mxu0
  %v676 = vadd.f32 0.0, %v675
  %v677 = vpop.f32.mrf.mxu0
  %678 = vdwg.mxu0
  %v679 = vadd.f32 %v605, %v676
  %v680 = vxor.u32 %v679, 2147483648
  %v681 = vmul.f32 %v680, 1.442695
  %v682 = vpow.pop %v681
  %v683 = vadd.f32 %v682, 1.0
  %v684 = vrcp.pop %v683
  %v685 = vmul.f32 1.0, %v684
  %v686 = vtanh.pop %v679
  %688 = vrot.lane.b32.xlu0 %v603, 32
  %v689 = vpop.permute.xlu0 %688
  %v691 = vmul.f32 %v685, %v689
  %693 = vrot.lane.b32.xlu0 %v686, 32
  %v694 = vpop.permute.xlu0 %693
  %v696 = vmul.f32 %v685, %v694
  %698 = vrot.lane.b32.xlu0 %v696, 32
  %v699 = vpop.permute.xlu0 %698
  %v701 = vadd.f32 %v691, %v699
  %v702 = vtanh.pop %v701
  %704 = vrot.lane.b32.xlu0 %v702, 32
  %v705 = vpop.permute.xlu0 %704
  %v707 = vmul.f32 %v685, %v705
  %709 = vrot.lane.b32.xlu0 %v701, 96
  %v710 = vpop.permute.xlu0 %709
  %712 = vst.msk [vmem:[#allocation3] sm:$0xff] %vm25, %v710
  %714 = vrot.lane.b32.xlu0 %v707, 64
  %v715 = vpop.permute.xlu0 %714
  %717 = vst.msk [vmem:[#allocation2] sm:$0xff] %vm25, %v715
  %v718 = vld [vmem:[#allocation2] sm:$0xff]
  %v719 = vld [vmem:[#allocation3] sm:$0xff]
  %s720 = scalar_lea.vmem %s0, 48
  %v721 = vld [vmem:[%s720] sm:$0xff]
  %v723 = vsel %vm25, %v718, 0
  %725 = vmatprep.subr.mxu0 0.0
  %726 = vmatpush1.msra.mxu0 0.0
  %727 = vmatprep.subr.mxu0 0.0
  %728 = vmatpush1.msra.mxu0 0.0
  %729 = vmatprep.subr.mxu0 0.0
  %730 = vmatpush1.msra.mxu0 0.0
  %731 = vmatprep.subr.mxu0 0.0
  %732 = vmatpush1.msra.mxu0 0.0
  %733 = vmatprep.subr.mxu0 0.0
  %734 = vmatpush1.msra.mxu0 0.0
  %735 = vmatprep.subr.mxu0 0.0
  %736 = vmatpush1.msra.mxu0 0.0
  %737 = vmatprep.subr.mxu0 0.0
  %738 = vmatpush1.msra.mxu0 0.0
  %739 = vmatprep.subr.mxu0 0.0
  %740 = vmatpush1.msra.mxu0 0.0
  %741 = vmatprep.subr.mxu0 0.0
  %742 = vmatpush1.msra.mxu0 0.0
  %743 = vmatprep.subr.mxu0 0.0
  %744 = vmatpush1.msra.mxu0 0.0
  %745 = vmatprep.subr.mxu0 0.0
  %746 = vmatpush1.msra.mxu0 0.0
  %747 = vmatprep.subr.mxu0 0.0
  %748 = vmatpush1.msra.mxu0 0.0
  %749 = vmatprep.subr.mxu0 0.0
  %750 = vmatpush1.msra.mxu0 %v21
  %751 = vmatprep.subr.mxu0 0.0
  %752 = vmatpush1.msra.mxu0 %v20
  %753 = vmatprep.subr.mxu0 0.0
  %754 = vmatpush1.msra.mxu0 %v19
  %755 = vmatprep.subr.mxu0 0.0
  %756 = vmatpush1.msra.mxu0 %v18
  %757 = vmatprep.subr.mxu0 0.0
  %758 = vmatpush2.msra.mxu0 0.0
  %759 = vmatprep.subr.mxu0 0.0
  %760 = vmatpush2.msra.mxu0 0.0
  %761 = vmatprep.subr.mxu0 0.0
  %762 = vmatpush2.msra.mxu0 0.0
  %763 = vmatprep.subr.mxu0 0.0
  %764 = vmatpush2.msra.mxu0 0.0
  %765 = vmatprep.subr.mxu0 0.0
  %766 = vmatpush2.msra.mxu0 0.0
  %767 = vmatprep.subr.mxu0 0.0
  %768 = vmatpush2.msra.mxu0 0.0
  %769 = vmatprep.subr.mxu0 0.0
  %770 = vmatpush2.msra.mxu0 0.0
  %771 = vmatprep.subr.mxu0 0.0
  %772 = vmatpush2.msra.mxu0 0.0
  %773 = vmatprep.subr.mxu0 0.0
  %774 = vmatpush2.msra.mxu0 0.0
  %775 = vmatprep.subr.mxu0 0.0
  %776 = vmatpush2.msra.mxu0 0.0
  %777 = vmatprep.subr.mxu0 0.0
  %778 = vmatpush2.msra.mxu0 0.0
  %779 = vmatprep.subr.mxu0 0.0
  %780 = vmatpush2.msra.mxu0 0.0
  %781 = vmatprep.subr.mxu0 0.0
  %782 = vmatpush2.msra.mxu0 0.0
  %783 = vmatprep.subr.mxu0 0.0
  %784 = vmatpush2.msra.mxu0 0.0
  %785 = vmatprep.subr.mxu0 0.0
  %786 = vmatpush2.msra.mxu0 0.0
  %787 = vmatprep.subr.mxu0 0.0
  %788 = vmatpush2.msra.mxu0 0.0
  %789 = vmatprep.mubr.f32.mxu0 0.0
  %790 = vmatmul.mubr.f32.gmra.mxu0 %v723
  %v791 = vpop.f32.mrf.mxu0
  %v792 = vadd.f32 0.0, %v791
  %v793 = vpop.f32.mrf.mxu0
  %794 = vdwg.mxu0
  %v795 = vadd.f32 %v721, %v792
  %v796 = vxor.u32 %v795, 2147483648
  %v797 = vmul.f32 %v796, 1.442695
  %v798 = vpow.pop %v797
  %v799 = vadd.f32 %v798, 1.0
  %v800 = vrcp.pop %v799
  %v801 = vmul.f32 1.0, %v800
  %v802 = vtanh.pop %v795
  %804 = vrot.lane.b32.xlu0 %v719, 32
  %v805 = vpop.permute.xlu0 %804
  %v807 = vmul.f32 %v801, %v805
  %809 = vrot.lane.b32.xlu0 %v802, 32
  %v810 = vpop.permute.xlu0 %809
  %v812 = vmul.f32 %v801, %v810
  %814 = vrot.lane.b32.xlu0 %v812, 32
  %v815 = vpop.permute.xlu0 %814
  %v817 = vadd.f32 %v807, %v815
  %v818 = vtanh.pop %v817
  %820 = vrot.lane.b32.xlu0 %v818, 32
  %v821 = vpop.permute.xlu0 %820
  %v823 = vmul.f32 %v801, %v821
  %825 = vrot.lane.b32.xlu0 %v817, 96
  %v826 = vpop.permute.xlu0 %825
  %828 = vst.msk [vmem:[#allocation3] sm:$0xff] %vm25, %v826
  %830 = vrot.lane.b32.xlu0 %v823, 64
  %v831 = vpop.permute.xlu0 %830
  %833 = vst.msk [vmem:[#allocation2] sm:$0xff] %vm25, %v831
  %v834 = vld [vmem:[#allocation2] sm:$0xff]
  %v835 = vld [vmem:[#allocation3] sm:$0xff]
  %s836 = scalar_lea.vmem %s0, 56
  %v837 = vld [vmem:[%s836] sm:$0xff]
  %v839 = vsel %vm25, %v834, 0
  %841 = vmatprep.subr.mxu0 0.0
  %842 = vmatpush1.msra.mxu0 0.0
  %843 = vmatprep.subr.mxu0 0.0
  %844 = vmatpush1.msra.mxu0 0.0
  %845 = vmatprep.subr.mxu0 0.0
  %846 = vmatpush1.msra.mxu0 0.0
  %847 = vmatprep.subr.mxu0 0.0
  %848 = vmatpush1.msra.mxu0 0.0
  %849 = vmatprep.subr.mxu0 0.0
  %850 = vmatpush1.msra.mxu0 0.0
  %851 = vmatprep.subr.mxu0 0.0
  %852 = vmatpush1.msra.mxu0 0.0
  %853 = vmatprep.subr.mxu0 0.0
  %854 = vmatpush1.msra.mxu0 0.0
  %855 = vmatprep.subr.mxu0 0.0
  %856 = vmatpush1.msra.mxu0 0.0
  %857 = vmatprep.subr.mxu0 0.0
  %858 = vmatpush1.msra.mxu0 0.0
  %859 = vmatprep.subr.mxu0 0.0
  %860 = vmatpush1.msra.mxu0 0.0
  %861 = vmatprep.subr.mxu0 0.0
  %862 = vmatpush1.msra.mxu0 0.0
  %863 = vmatprep.subr.mxu0 0.0
  %864 = vmatpush1.msra.mxu0 0.0
  %865 = vmatprep.subr.mxu0 0.0
  %866 = vmatpush1.msra.mxu0 %v21
  %867 = vmatprep.subr.mxu0 0.0
  %868 = vmatpush1.msra.mxu0 %v20
  %869 = vmatprep.subr.mxu0 0.0
  %870 = vmatpush1.msra.mxu0 %v19
  %871 = vmatprep.subr.mxu0 0.0
  %872 = vmatpush1.msra.mxu0 %v18
  %873 = vmatprep.subr.mxu0 0.0
  %874 = vmatpush2.msra.mxu0 0.0
  %875 = vmatprep.subr.mxu0 0.0
  %876 = vmatpush2.msra.mxu0 0.0
  %877 = vmatprep.subr.mxu0 0.0
  %878 = vmatpush2.msra.mxu0 0.0
  %879 = vmatprep.subr.mxu0 0.0
  %880 = vmatpush2.msra.mxu0 0.0
  %881 = vmatprep.subr.mxu0 0.0
  %882 = vmatpush2.msra.mxu0 0.0
  %883 = vmatprep.subr.mxu0 0.0
  %884 = vmatpush2.msra.mxu0 0.0
  %885 = vmatprep.subr.mxu0 0.0
  %886 = vmatpush2.msra.mxu0 0.0
  %887 = vmatprep.subr.mxu0 0.0
  %888 = vmatpush2.msra.mxu0 0.0
  %889 = vmatprep.subr.mxu0 0.0
  %890 = vmatpush2.msra.mxu0 0.0
  %891 = vmatprep.subr.mxu0 0.0
  %892 = vmatpush2.msra.mxu0 0.0
  %893 = vmatprep.subr.mxu0 0.0
  %894 = vmatpush2.msra.mxu0 0.0
  %895 = vmatprep.subr.mxu0 0.0
  %896 = vmatpush2.msra.mxu0 0.0
  %897 = vmatprep.subr.mxu0 0.0
  %898 = vmatpush2.msra.mxu0 0.0
  %899 = vmatprep.subr.mxu0 0.0
  %900 = vmatpush2.msra.mxu0 0.0
  %901 = vmatprep.subr.mxu0 0.0
  %902 = vmatpush2.msra.mxu0 0.0
  %903 = vmatprep.subr.mxu0 0.0
  %904 = vmatpush2.msra.mxu0 0.0
  %905 = vmatprep.mubr.f32.mxu0 0.0
  %906 = vmatmul.mubr.f32.gmra.mxu0 %v839
  %v907 = vpop.f32.mrf.mxu0
  %v908 = vadd.f32 0.0, %v907
  %v909 = vpop.f32.mrf.mxu0
  %910 = vdwg.mxu0
  %v911 = vadd.f32 %v837, %v908
  %v912 = vxor.u32 %v911, 2147483648
  %v913 = vmul.f32 %v912, 1.442695
  %v914 = vpow.pop %v913
  %v915 = vadd.f32 %v914, 1.0
  %v916 = vrcp.pop %v915
  %v917 = vmul.f32 1.0, %v916
  %v918 = vtanh.pop %v911
  %920 = vrot.lane.b32.xlu0 %v835, 32
  %v921 = vpop.permute.xlu0 %920
  %v923 = vmul.f32 %v917, %v921
  %925 = vrot.lane.b32.xlu0 %v918, 32
  %v926 = vpop.permute.xlu0 %925
  %v928 = vmul.f32 %v917, %v926
  %930 = vrot.lane.b32.xlu0 %v928, 32
  %v931 = vpop.permute.xlu0 %930
  %v933 = vadd.f32 %v923, %v931
  %v934 = vtanh.pop %v933
  %936 = vrot.lane.b32.xlu0 %v934, 32
  %v937 = vpop.permute.xlu0 %936
  %v939 = vmul.f32 %v917, %v937
  %941 = vrot.lane.b32.xlu0 %v933, 96
  %v942 = vpop.permute.xlu0 %941
  %944 = vst.msk [vmem:[#allocation3] sm:$0xff] %vm25, %v942
  %946 = vrot.lane.b32.xlu0 %v939, 64
  %v947 = vpop.permute.xlu0 %946
  %949 = vst.msk [vmem:[#allocation2] sm:$0xff] %vm25, %v947
  %v950 = vld [vmem:[#allocation2] sm:$0xff]
  %951 = vst.msk [vmem:[%s2] sm:$0xff] %vm25, %v950
  // Predicated region
  $region14: #{candle_lstm_pallas.1} parent=0 // pred_check
    _
  $region15: #{candle_lstm_pallas.1} parent=0 // pred_check_branch
    %953 = sbr.rel (0) target = $region17
  $region16: #{candle_lstm_pallas.1} parent=0 // pred_region
    _
  $region17: #{candle_lstm_pallas.1} parent=0 // pred_fallthru
    _
  // Predicated region
  $region18: #{candle_lstm_pallas.1} parent=0 // pred_check
    _
  $region19: #{candle_lstm_pallas.1} parent=0 // pred_check_branch
    %955 = sbr.rel (0) target = $region21
  $region20: #{candle_lstm_pallas.1} parent=0 // pred_region
    _
  $region21: #{candle_lstm_pallas.1} parent=0 // pred_fallthru
    _

</llo_original>
